<compile_context>
chip_gen: v6e
topology: v6e:2x2x1
jax: 0.10.0
libtpu: 0.0.40
codegen_flags: <defaults>
</compile_context>

<pallas_src>
import jax
import jax.numpy as jnp
from jax.experimental import pallas as pl
from jax.experimental.pallas import tpu as pltpu


# ----------------------------------------------------------------------------
# Kernel
# ----------------------------------------------------------------------------
def _make_kernel(compute_dtype):
    def kernel(x_ref, w_ref, b_ref, o_ref):
        # x_ref: [tm, S], w_ref: [S, te], b_ref: [1, te], o_ref: [tm, te]
        x = x_ref[...]
        w = w_ref[...]
        if compute_dtype is not None:
            # In-kernel cast: MXU sees narrow operands, accumulation stays f32.
            x = x.astype(compute_dtype)
            w = w.astype(compute_dtype)
        acc = jnp.dot(x, w, preferred_element_type=jnp.float32)
        o_ref[...] = (acc + b_ref[...].astype(jnp.float32)).astype(o_ref.dtype)

    return kernel


# ----------------------------------------------------------------------------
# One-time parameter preparation (NOT per call)
# ----------------------------------------------------------------------------
def prepare_variate_embedding_params(weight, bias, *, weight_dtype=None):
    """PyTorch nn.Linear params -> kernel layout, done once.

    weight [E, S] -> [S, E] (pre-transposed); bias [E] -> [1, E].
    Optionally pre-cast the weight (e.g. bf16) to halve its HBM fetch.
    """
    w_t = jnp.asarray(weight).T
    if weight_dtype is not None:
        w_t = w_t.astype(weight_dtype)
    b2d = jnp.asarray(bias).reshape(1, -1)
    return w_t, b2d


# ----------------------------------------------------------------------------
# Tile selection helpers
# ----------------------------------------------------------------------------
def _cdiv(a, b):
    return -(-a // b)


def _round_up(x, m):
    return ((x + m - 1) // m) * m


def _choose_e_tile(E, block_e):
    """Single full-E tile if it fits, else a multiple of 128 minimizing the
    dead columns in the last (partial) block; prefer bigger tiles on ties."""
    if E <= block_e:
        return E
    best_te, best_waste = 128, None
    for te in range(128, block_e + 1, 128):
        rem = E % te
        waste = 0 if rem == 0 else te - rem
        if best_waste is None or waste < best_waste or (
                waste == best_waste and te > best_te):
            best_te, best_waste = te, waste
    return best_te


def _choose_m_tile(M, block_m, n_e_tiles):
    """Multiple-of-8 M tile (or full M) with minimal padding; guarantee >= 2
    tiles when E has a single tile so both v7x TensorCores get work."""
    if M % 8 != 0 and M <= block_m:
        return M  # 'equal full array dim' satisfies the (8,128) rule
    n = _cdiv(M, block_m)
    if n_e_tiles == 1 and n == 1 and M >= 16:
        n = 2
    return _round_up(_cdiv(M, n), 8)


# ----------------------------------------------------------------------------
# Forward wrapper
# ----------------------------------------------------------------------------
def variate_embedding(x, weight_t, bias2d, *, block_m=1024, block_e=512,
                      compute_dtype=jnp.bfloat16, out_dtype=None,
                      force_pallas=False, small_problem_elems=1 << 18,
                      vmem_limit_bytes=None):
    """x: [B, C, S]; weight_t: [S, E] (pre-transposed); bias2d: [1, E]."""
    B, C, S = x.shape
    S_w, E = weight_t.shape
    assert S_w == S, "weight_t must be [seq_len, embed_dim]"
    assert bias2d.shape == (1, E)
    M = B * C
    if out_dtype is None:
        out_dtype = x.dtype

    # Small-problem fallback: kernel launch / per-step overhead dwarfs work.
    if not force_pallas and (M * S * E) < small_problem_elems:
        y = jnp.einsum("bcs,se->bce", x, weight_t,
                       preferred_element_type=jnp.float32)
        return (y + bias2d[0].astype(jnp.float32)).astype(out_dtype)

    x2d = x.reshape(M, S)  # contiguous -> metadata-only reshape, no HBM copy

    te = _choose_e_tile(E, block_e)
    n_e = _cdiv(E, te)
    tm = _choose_m_tile(M, block_m, n_e)
    n_m = _cdiv(M, tm)

    out2d = pl.pallas_call(
        _make_kernel(compute_dtype),
        out_shape=jax.ShapeDtypeStruct((M, E), out_dtype),
        grid_spec=pltpu.PrefetchScalarGridSpec(
            num_scalar_prefetch=0,
            # E is the OUTER axis, M the inner one: the weight/bias block
            # index (0, j) is constant across the M sweep, so Pallas keeps
            # it resident in VMEM and only re-DMAs it once per E tile.
            grid=(n_e, n_m),
            in_specs=[
                pl.BlockSpec((tm, S), lambda j, i: (i, 0)),   # activations
                pl.BlockSpec((S, te), lambda j, i: (0, j)),   # weight (resident)
                pl.BlockSpec((1, te), lambda j, i: (0, j)),   # bias   (resident)
            ],
            out_specs=pl.BlockSpec((tm, te), lambda j, i: (i, j)),
        ),
        compiler_params=pltpu.CompilerParams(
            dimension_semantics=("parallel", "parallel"),
            vmem_limit_bytes=vmem_limit_bytes,
        ),
    )(x2d, weight_t, bias2d)

    return out2d.reshape(B, C, E)


# ----------------------------------------------------------------------------
# Self-test
# ----------------------------------------------------------------------------
if __name__ == "__main__":
    key = jax.random.PRNGKey(0)
    kx, kw, kb = jax.random.split(key, 3)

    # ---- Case 1: module-scale shapes; force the Pallas path (fp32 compute
    # so the check can be tight).  Single grid point, non-128 E tile. -------
    B, C, SEQ_LEN, EMBED_DIM = 2, 4, 16, 32
    bound = 1.0 / (SEQ_LEN ** 0.5)
    x = jax.random.normal(kx, (B, C, SEQ_LEN), dtype=jnp.float32)
    weight = jax.random.uniform(kw, (EMBED_DIM, SEQ_LEN), dtype=jnp.float32,
                                minval=-bound, maxval=bound)
    bias = jax.random.uniform(kb, (EMBED_DIM,), dtype=jnp.float32,
                              minval=-bound, maxval=bound)
    w_t, b2d = prepare_variate_embedding_params(weight, bias)
    ref = jnp.einsum("bcs,es->bce", x, weight) + bias

    out = jax.block_until_ready(
        variate_embedding(x, w_t, b2d, force_pallas=True, compute_dtype=None))
    assert out.shape == (B, C, EMBED_DIM)
    assert jnp.allclose(out, ref, atol=1e-5, rtol=1e-5)

    # Auto path at this tiny size falls back to einsum; must match too.
    out_auto = jax.block_until_ready(variate_embedding(x, w_t, b2d))
    assert jnp.allclose(out_auto, ref, atol=1e-5, rtol=1e-5)

    # ---- Case 2: larger M so the multi-tile grid (E outer x M inner, two
    # balanced M tiles, no padding) and the default bf16 path are exercised.
    B2, C2, S2, E2 = 4, 160, 96, 256          # M = 640 -> 2 x 320-row tiles
    kx2, kw2, kb2 = jax.random.split(jax.random.PRNGKey(1), 3)
    bound2 = 1.0 / (S2 ** 0.5)
    x2 = jax.random.normal(kx2, (B2, C2, S2), dtype=jnp.float32)
    w2 = jax.random.uniform(kw2, (E2, S2), dtype=jnp.float32,
                            minval=-bound2, maxval=bound2)
    b2v = jax.random.uniform(kb2, (E2,), dtype=jnp.float32,
                             minval=-bound2, maxval=bound2)
    w2_t, b2_2d = prepare_variate_embedding_params(w2, b2v)

    out2 = jax.block_until_ready(variate_embedding(x2, w2_t, b2_2d))
    ref2 = jnp.einsum("bcs,es->bce", x2, w2) + b2v
    assert out2.shape == (B2, C2, E2)
    assert jnp.allclose(out2, ref2, atol=3e-2, rtol=3e-2)   # bf16 MXU operands

    print("KERNEL_OK")
</pallas_src>

<mosaic_0001>
module attributes {stable_mosaic.version = 11 : i64} {
  func.func @kernel(%arg0: i32, %arg1: i32, %arg2: memref<8x16xf32, #tpu.memory_space<vmem>>, %arg3: memref<16x32xf32, #tpu.memory_space<vmem>>, %arg4: memref<1x32xf32, #tpu.memory_space<vmem>>, %arg5: memref<8x32xf32, #tpu.memory_space<vmem>>) attributes {dimension_semantics = [#tpu.dimension_semantics<parallel>, #tpu.dimension_semantics<parallel>], iteration_bounds = array<i64: 1, 1>, scalar_prefetch = 0 : i64, scratch_operands = 0 : i64, tpu.core_type = #tpu.core_type<tc>, window_params = [{transform_indices = @transform_0, window_bounds = array<i64: 8, 16>}, {transform_indices = @transform_1, window_bounds = array<i64: 16, 32>}, {transform_indices = @transform_2, window_bounds = array<i64: 1, 32>}, {transform_indices = @transform_3, window_bounds = array<i64: 8, 32>}]} {
    %c0 = arith.constant 0 : index
    %c0_0 = arith.constant 0 : index
    %0 = vector.load %arg2[%c0, %c0_0] : memref<8x16xf32, #tpu.memory_space<vmem>>, vector<8x16xf32>
    %c0_1 = arith.constant 0 : index
    %c0_2 = arith.constant 0 : index
    %1 = vector.load %arg3[%c0_1, %c0_2] : memref<16x32xf32, #tpu.memory_space<vmem>>, vector<16x32xf32>
    %cst = arith.constant dense<0.000000e+00> : vector<8x32xf32>
    %2 = tpu.matmul %0, %1, %cst {dimension_numbers = #tpu.dot_dimension_numbers<[1], [0], [0], [1], [0, 0, 1, 1], [], []>} : vector<8x16xf32>, vector<16x32xf32>, vector<8x32xf32> -> vector<8x32xf32>
    %c0_3 = arith.constant 0 : index
    %c0_4 = arith.constant 0 : index
    %3 = vector.load %arg4[%c0_3, %c0_4] : memref<1x32xf32, #tpu.memory_space<vmem>>, vector<1x32xf32>
    %4 = vector.broadcast %3 : vector<1x32xf32> to vector<8x32xf32>
    %5 = arith.addf %2, %4 : vector<8x32xf32>
    %c0_5 = arith.constant 0 : index
    %c0_6 = arith.constant 0 : index
    %6 = vector.load %arg5[%c0_5, %c0_6] : memref<8x32xf32, #tpu.memory_space<vmem>>, vector<8x32xf32>
    tpu.vector_store %arg5[%c0_5, %c0_6], %5 {strides = array<i32>} : memref<8x32xf32, #tpu.memory_space<vmem>>, vector<8x32xf32>,
    return
  }
  func.func @transform_0(%arg0: i32, %arg1: i32) -> (i32, i32) {
    %c0_i32 = arith.constant 0 : i32
    %c0_i32_0 = arith.constant 0 : i32
    return %arg1, %c0_i32 : i32, i32
  }
  func.func @transform_1(%arg0: i32, %arg1: i32) -> (i32, i32) {
    %c0_i32 = arith.constant 0 : i32
    %c0_i32_0 = arith.constant 0 : i32
    return %c0_i32, %arg0 : i32, i32
  }
  func.func @transform_2(%arg0: i32, %arg1: i32) -> (i32, i32) {
    %c0_i32 = arith.constant 0 : i32
    %c0_i32_0 = arith.constant 0 : i32
    return %c0_i32, %arg0 : i32, i32
  }
  func.func @transform_3(%arg0: i32, %arg1: i32) -> (i32, i32) {
    %c0_i32 = arith.constant 0 : i32
    return %arg1, %arg0 : i32, i32
  }
}

</mosaic_0001>

<llo_original>
// kernel: tpu_custom_call.1
$region0: #{tpu_custom_call.1}
  #allocation0 [shape = 'u32[]', space=smem, size = 0x4, offset = 0x4, fixed_abs, tag = 'smem constant byte address 0x4 - core index']
  #allocation1 [shape = 'u32[144,128]{1,0:T(1,128)}', space=vmem, size = 0x12000, scoped, tag = 'internal scratch']
  %s0 = inlined_call_operand.hbm [shape: f32[8,16], index: 0, kind: input, shape index: {}]
  %s1 = inlined_call_operand.hbm [shape: f32[16,32], index: 1, kind: input, shape index: {}]
  %s2 = inlined_call_operand.vmem [shape: f32[1,32], index: 2, kind: input, shape index: {}]
  %s3 = inlined_call_operand.hbm [shape: f32[8,32], index: 3, kind: output, shape index: {}]
  %s4 = sld [smem:[#allocation0]]
  $region30: #{tpu_custom_call.1} parent=0
    _
  %s6 = ssub.s32 1, %s4
  %s7 = scalar_select 0, %s6, %s4
  $region1: #{tpu_custom_call.1} parent=0
    #allocation2 [shape = 'u8[4096]{0}', space=vmem, size = 0x1000, scoped, tag = 'input window, operand 0, single buffered']
    #allocation3 [shape = 's32[1]{0}', space=sflag, size = 0x4, scoped, tag = 'scoped memory for tpu_custom_call.1']
    #allocation4 [shape = 's32[1]{0}', space=sflag, size = 0x4, scoped, tag = 'scoped memory for tpu_custom_call.1']
    #allocation5 [shape = 'u8[8192]{0}', space=vmem, size = 0x2000, scoped, tag = 'input window, operand 1, single buffered']
    #allocation6 [shape = 's32[1]{0}', space=sflag, size = 0x4, scoped, tag = 'scoped memory for tpu_custom_call.1']
    #allocation7 [shape = 'u8[4096]{0}', space=vmem, size = 0x1000, scoped, tag = 'output window, operand 0, single buffered']
    %8 = vsyncpa [#allocation3], 0
    %9 = vsyncpa [#allocation6], 0
    %10 = vsyncpa [#allocation4], 0
    // Predicated region
    $region2: #{tpu_custom_call.1} parent=1 // pred_check
      _
    $region3: #{tpu_custom_call.1} parent=1 // pred_check_branch
      %12 = sbr.rel (0) target = $region5
    $region4: #{tpu_custom_call.1} parent=1 // pred_region
      %s14 = ssub.s32 128, 128
      %15 = vsyncadd [#allocation3], %s14
      %s17 = sshll.u32 [#allocation2], 4
      %s18 = int_to_ptr.vmem [resolvable:$true] %s17
      %20 = dma.hbm_to_vmem [thread:$0]  %s0, 128, %s18, [#allocation3]
    $region5: #{tpu_custom_call.1} parent=1 // pred_fallthru
      _
    // Predicated region
    $region6: #{tpu_custom_call.1} parent=1 // pred_check
      _
    $region7: #{tpu_custom_call.1} parent=1 // pred_check_branch
      %22 = sbr.rel (0) target = $region9
    $region8: #{tpu_custom_call.1} parent=1 // pred_region
      %s24 = ssub.s32 256, 256
      %25 = vsyncadd [#allocation6], %s24
      %s26 = sshll.u32 [#allocation5], 4
      %s27 = int_to_ptr.vmem [resolvable:$true] %s26
      %32 = dma.hbm_to_vmem [thread:$0]  %s1, 256, %s27, [#allocation6], 128, 128, 8
    $region9: #{tpu_custom_call.1} parent=1 // pred_fallthru
      _
    // Predicated region
    $region10: #{tpu_custom_call.1} parent=1 // pred_check
      _
    $region11: #{tpu_custom_call.1} parent=1 // pred_check_branch
      %34 = sbr.rel (0) target = $region13
    $region12: #{tpu_custom_call.1} parent=1 // pred_region
      _
    $region13: #{tpu_custom_call.1} parent=1 // pred_fallthru
      _
    // Predicated region
    $region14: #{tpu_custom_call.1} parent=1 // pred_check
      _
    $region15: #{tpu_custom_call.1} parent=1 // pred_check_branch
      %36 = sbr.rel (0) target = $region17
    $region16: #{tpu_custom_call.1} parent=1 // pred_region
      %37 = dma.done [#allocation3], 128
    $region17: #{tpu_custom_call.1} parent=1 // pred_fallthru
      _
    // Predicated region
    $region18: #{tpu_custom_call.1} parent=1 // pred_check
      _
    $region19: #{tpu_custom_call.1} parent=1 // pred_check_branch
      %39 = sbr.rel (0) target = $region21
    $region20: #{tpu_custom_call.1} parent=1 // pred_region
      %40 = dma.done [#allocation6], 256
    $region21: #{tpu_custom_call.1} parent=1 // pred_fallthru
      _
    %v41 = vld [vmem:[#allocation2] sm:$0xff]
    %v42 = vld [vmem:[#allocation5] sm:$0xff]
    %v43 = vld [vmem:[#allocation5 + $0x8] sm:$0xff]
    %v44 = vld [vmem:[%s2] sm:$0x1]
    %v46 = vlaneseq
    %v47 = vshrl.u32 %v46, 7
    %v48 = vsub.s32 0, %v47
    %v49 = vrot.slane %v44, %v48
    %vm51 = vcmask 130048
    %v53 = vsel %vm51, %v41, 0
    %55 = vmatprep.subr.mxu0 0.0
    %56 = vmatpush1.msra.mxu0 0.0
    %57 = vmatprep.subr.mxu0 0.0
    %58 = vmatpush1.msra.mxu0 0.0
    %59 = vmatprep.subr.mxu0 0.0
    %60 = vmatpush1.msra.mxu0 0.0
    %61 = vmatprep.subr.mxu0 0.0
    %62 = vmatpush1.msra.mxu0 0.0
    %63 = vmatprep.subr.mxu0 0.0
    %64 = vmatpush1.msra.mxu0 0.0
    %65 = vmatprep.subr.mxu0 0.0
    %66 = vmatpush1.msra.mxu0 0.0
    %67 = vmatprep.subr.mxu0 0.0
    %68 = vmatpush1.msra.mxu0 0.0
    %69 = vmatprep.subr.mxu0 0.0
    %70 = vmatpush1.msra.mxu0 0.0
    %71 = vmatprep.subr.mxu0 0.0
    %72 = vmatpush1.msra.mxu0 0.0
    %73 = vmatprep.subr.mxu0 0.0
    %74 = vmatpush1.msra.mxu0 0.0
    %75 = vmatprep.subr.mxu0 0.0
    %76 = vmatpush1.msra.mxu0 0.0
    %77 = vmatprep.subr.mxu0 0.0
    %78 = vmatpush1.msra.mxu0 0.0
    %79 = vmatprep.subr.mxu0 0.0
    %80 = vmatpush1.msra.mxu0 0.0
    %81 = vmatprep.subr.mxu0 0.0
    %82 = vmatpush1.msra.mxu0 0.0
    %83 = vmatprep.subr.mxu0 0.0
    %84 = vmatpush1.msra.mxu0 %v43
    %85 = vmatprep.subr.mxu0 0.0
    %86 = vmatpush1.msra.mxu0 %v42
    %87 = vmatprep.subr.mxu0 0.0
    %88 = vmatpush2.msra.mxu0 0.0
    %89 = vmatprep.subr.mxu0 0.0
    %90 = vmatpush2.msra.mxu0 0.0
    %91 = vmatprep.subr.mxu0 0.0
    %92 = vmatpush2.msra.mxu0 0.0
    %93 = vmatprep.subr.mxu0 0.0
    %94 = vmatpush2.msra.mxu0 0.0
    %95 = vmatprep.subr.mxu0 0.0
    %96 = vmatpush2.msra.mxu0 0.0
    %97 = vmatprep.subr.mxu0 0.0
    %98 = vmatpush2.msra.mxu0 0.0
    %99 = vmatprep.subr.mxu0 0.0
    %100 = vmatpush2.msra.mxu0 0.0
    %101 = vmatprep.subr.mxu0 0.0
    %102 = vmatpush2.msra.mxu0 0.0
    %103 = vmatprep.subr.mxu0 0.0
    %104 = vmatpush2.msra.mxu0 0.0
    %105 = vmatprep.subr.mxu0 0.0
    %106 = vmatpush2.msra.mxu0 0.0
    %107 = vmatprep.subr.mxu0 0.0
    %108 = vmatpush2.msra.mxu0 0.0
    %109 = vmatprep.subr.mxu0 0.0
    %110 = vmatpush2.msra.mxu0 0.0
    %111 = vmatprep.subr.mxu0 0.0
    %112 = vmatpush2.msra.mxu0 0.0
    %113 = vmatprep.subr.mxu0 0.0
    %114 = vmatpush2.msra.mxu0 0.0
    %115 = vmatprep.subr.mxu0 0.0
    %116 = vmatpush2.msra.mxu0 0.0
    %117 = vmatprep.subr.mxu0 0.0
    %118 = vmatpush2.msra.mxu0 0.0
    %119 = vmatprep.mubr.f32.mxu0 0.0
    %120 = vmatmul.mubr.f32.gmra.mxu0 %v53
    %v121 = vpop.f32.mrf.mxu0
    %v122 = vadd.f32 %v49, %v121
    %v123 = vpop.f32.mrf.mxu0
    %124 = vdwg.mxu0
    %vm125 = vcmask 261120
    %126 = vst.msk [vmem:[#allocation7] sm:$0xff] %vm125, %v122
    // Predicated region
    $region22: #{tpu_custom_call.1} parent=1 // pred_check
      _
    $region23: #{tpu_custom_call.1} parent=1 // pred_check_branch
      %128 = sbr.rel (0) target = $region25
    $region24: #{tpu_custom_call.1} parent=1 // pred_region
      %s130 = ssub.s32 128, 128
      %131 = vsyncadd [#allocation4], %s130
      %s133 = sshll.u32 [#allocation7], 4
      %s134 = int_to_ptr.vmem [resolvable:$true] %s133
      %136 = dma.vmem_to_hbm [thread:$0]  %s134, 128, %s3, [#allocation4]
    $region25: #{tpu_custom_call.1} parent=1 // pred_fallthru
      _
    // Predicated region
    $region26: #{tpu_custom_call.1} parent=1 // pred_check
      _
    $region27: #{tpu_custom_call.1} parent=1 // pred_check_branch
      %138 = sbr.rel (0) target = $region29
    $region28: #{tpu_custom_call.1} parent=1 // pred_region
      %139 = dma.done [#allocation4], 128
    $region29: #{tpu_custom_call.1} parent=1 // pred_fallthru
      _
    %140 = vsyncpa [#allocation3], 1
    %141 = vsyncpa [#allocation6], 1
    %142 = vsyncpa [#allocation4], 1

</llo_original>
